<compile_context>
chip_gen: v7x
topology: tpu7x:2x2x1
jax: 0.10.0
libtpu: 0.0.40
codegen_flags: <defaults>
</compile_context>

<pallas_src>
import functools

import jax
import jax.numpy as jnp
from jax.experimental import pallas as pl
from jax.experimental.pallas import tpu as pltpu


_LANE = 128


def _round_up(x, m):
    return ((x + m - 1) // m) * m


def _vmem_budget_bytes():
    """Generation-aware VMEM budget (v5e/v6e: 128 MiB, v7x: 64 MiB physical)."""
    cap = None
    try:
        cap = getattr(pltpu.get_tpu_info(), "vmem_capacity_bytes", None)
    except Exception:
        cap = None
    if not cap:
        cap = 64 * 1024 * 1024          # conservative default: v7x physical VMEM
    return min(int(cap) * 3 // 4, 100 * 1024 * 1024)


# ----------------------------------------------------------------------------
# Fused small-graph path: whole layer stack in one grid-less pallas_call
# ----------------------------------------------------------------------------
def _fused_stack_kernel(*refs, n_layers):
    # refs = (adj, h, w_0, b_0, ..., w_{L-1}, b_{L-1}, out)
    adj_ref, h_ref = refs[0], refs[1]
    out_ref = refs[-1]
    adj = adj_ref[...]                                   # bf16, VMEM resident
    h = h_ref[...]                                       # bf16
    for i in range(n_layers):
        w_ref = refs[2 + 2 * i]
        b_ref = refs[3 + 2 * i]
        hw = jnp.dot(h, w_ref[...], preferred_element_type=jnp.float32)
        o = jnp.dot(adj, hw.astype(jnp.bfloat16),
                    preferred_element_type=jnp.float32) + b_ref[...]
        if i < n_layers - 1:
            h = jnp.maximum(o, 0.0).astype(jnp.bfloat16)
        else:
            out_ref[...] = o.astype(out_ref.dtype)


def fused_stack(adj, h, padded_params, vmem_limit):
    n_pad = adj.shape[0]
    f_out_pad = padded_params[-1][0].shape[1]
    operands = [adj, h]
    for w_p, b_p in padded_params:
        operands.extend((w_p, b_p))
    kernel = functools.partial(_fused_stack_kernel, n_layers=len(padded_params))
    return pl.pallas_call(
        kernel,
        out_shape=jax.ShapeDtypeStruct((n_pad, f_out_pad), jnp.float32),
        compiler_params=pltpu.CompilerParams(vmem_limit_bytes=vmem_limit),
    )(*operands)


def _fused_fits(n_pad, params, budget):
    """Rough VMEM estimate for the fully fused stack."""
    f_pads = [(_round_up(w.shape[0], _LANE), _round_up(w.shape[1], _LANE))
              for (w, _) in params]
    max_f = max(max(fi, fo) for fi, fo in f_pads)
    w_bytes = sum(fi * fo * 2 + fo * 4 for fi, fo in f_pads)
    need = (n_pad * n_pad * 2                 # Â (bf16)
            + n_pad * f_pads[0][0] * 2        # H (bf16)
            + n_pad * f_pads[-1][1] * 4       # output (f32)
            + 4 * n_pad * max_f * 4           # in-kernel temporaries (hw, o, h)
            + w_bytes)
    return need <= budget


# ----------------------------------------------------------------------------
# Streaming path, kernel 1: feature transform  HW = H @ W  (once per layer)
# ----------------------------------------------------------------------------
def _feature_transform_kernel(h_ref, w_ref, hw_ref):
    hw_ref[...] = jnp.dot(
        h_ref[...], w_ref[...], preferred_element_type=jnp.float32
    ).astype(hw_ref.dtype)


def feature_transform(h, w, *, tm, vmem_limit):
    n, f_in = h.shape
    f_out = w.shape[1]
    assert n % tm == 0
    return pl.pallas_call(
        _feature_transform_kernel,
        out_shape=jax.ShapeDtypeStruct((n, f_out), jnp.bfloat16),
        grid=(n // tm,),
        in_specs=[
            pl.BlockSpec((tm, f_in), lambda i: (i, 0)),     # row tile of H
            pl.BlockSpec((f_in, f_out), lambda i: (0, 0)),  # full W (small)
        ],
        out_specs=pl.BlockSpec((tm, f_out), lambda i: (i, 0)),
        compiler_params=pltpu.CompilerParams(
            dimension_semantics=("parallel",),
            vmem_limit_bytes=vmem_limit,
        ),
    )(h, w)


def _choose_ft_tile(n_pad, f_ip, f_op, budget):
    for cand in (4096, 2048, 1024, 512):
        if n_pad % cand != 0:
            continue
        need = 2 * cand * f_ip * 2 + 2 * f_ip * f_op * 2 + 2 * cand * f_op * 2
        if need <= budget:
            return cand
    return 512


# ----------------------------------------------------------------------------
# Streaming path, kernel 2: out = Â @ HW + b (+ReLU), K-tiled over nodes
# ----------------------------------------------------------------------------
def _aggregate_kernel(adj_ref, hw_ref, b_ref, out_ref, acc_ref, *,
                      apply_relu, hw_resident, tk):
    k = pl.program_id(1)

    @pl.when(k == 0)
    def _():
        acc_ref[...] = jnp.zeros_like(acc_ref)

    if hw_resident:
        # Full HW lives in VMEM (constant index_map); slice the k-slab locally.
        hw = hw_ref[pl.ds(pl.multiple_of(k * tk, tk), tk), :]
    else:
        hw = hw_ref[...]
    acc_ref[...] += jnp.dot(adj_ref[...], hw, preferred_element_type=jnp.float32)

    @pl.when(k == pl.num_programs(1) - 1)
    def _():
        out = acc_ref[...] + b_ref[...]       # bias folded into finalize only
        if apply_relu:
            out = jnp.maximum(out, 0.0)
        out_ref[...] = out.astype(out_ref.dtype)


def aggregate(adj, hw, b, *, apply_relu, out_dtype, tm, tk, hw_resident,
              vmem_limit):
    n = adj.shape[0]
    f_out = hw.shape[1]
    assert n % tm == 0 and n % tk == 0
    if hw_resident:
        hw_spec = pl.BlockSpec((n, f_out), lambda i, k: (0, 0))    # resident
    else:
        hw_spec = pl.BlockSpec((tk, f_out), lambda i, k: (k, 0))   # streamed slab
    kernel = functools.partial(_aggregate_kernel, apply_relu=apply_relu,
                               hw_resident=hw_resident, tk=tk)
    return pl.pallas_call(
        kernel,
        out_shape=jax.ShapeDtypeStruct((n, f_out), out_dtype),
        grid=(n // tm, n // tk),
        in_specs=[
            pl.BlockSpec((tm, tk), lambda i, k: (i, k)),           # Â tile (bf16)
            hw_spec,                                               # HW (bf16)
            pl.BlockSpec((1, f_out), lambda i, k: (0, 0)),         # bias (f32)
        ],
        out_specs=pl.BlockSpec((tm, f_out), lambda i, k: (i, 0)),
        scratch_shapes=[pltpu.VMEM((tm, f_out), jnp.float32)],
        compiler_params=pltpu.CompilerParams(
            dimension_semantics=("parallel", "arbitrary"),
            vmem_limit_bytes=vmem_limit,
        ),
    )(adj, hw, b)


def _choose_agg_tiles(n_pad):
    """Large tiles; keep an even number of row tiles for v7x's 2 TensorCores."""
    tm = 512 if (n_pad // 512) % 2 == 0 else 256
    if n_pad % 2048 == 0:
        tk = 2048
    elif n_pad % 1024 == 0:
        tk = 1024
    else:
        tk = 512
    return tm, tk


def _hw_resident_fits(n_pad, f_op, tm, tk, budget):
    need = (2 * tm * tk * 2          # Â double buffer
            + 2 * n_pad * f_op * 2   # resident HW (assume double-buffered)
            + 2 * tm * f_op * 4      # output buffers
            + tm * f_op * 4          # f32 accumulator
            + 2 * f_op * 4)          # bias
    return need <= int(budget * 0.9)


# ----------------------------------------------------------------------------
# Plain-JAX glue: parameters, normalized adjacency, padding, layer stack
# ----------------------------------------------------------------------------
def init_params(key, in_feats, n_hidden, n_classes, n_layers):
    """Glorot-uniform weights + zero bias for (n_layers + 1) GCN layers."""
    dims = [in_feats] + [n_hidden] * n_layers + [n_classes]
    params = []
    for i in range(len(dims) - 1):
        key, wk = jax.random.split(key)
        fan_in, fan_out = dims[i], dims[i + 1]
        limit = (6.0 / (fan_in + fan_out)) ** 0.5
        w = jax.random.uniform(wk, (fan_in, fan_out), jnp.float32, -limit, limit)
        b = jnp.zeros((fan_out,), jnp.float32)
        params.append((w, b))
    return params


def normalized_adjacency(edge_index, num_nodes):
    """Â = D^{-1/2} (A + I) D^{-1/2} from a (2, E) edge_index (dense)."""
    # TODO(synk): duplicate edges are deduplicated and pre-existing self-loops
    # get weight 2; differs from PyG GCNConv's add_self_loops on multigraphs.
    src, dst = edge_index[0], edge_index[1]
    a = jnp.zeros((num_nodes, num_nodes), jnp.float32)
    a = a.at[dst, src].set(1.0)                       # messages flow src -> dst
    a = a + jnp.eye(num_nodes, dtype=jnp.float32)     # self loops
    deg = jnp.sum(a, axis=1)
    d_inv_sqrt = jnp.where(deg > 0, 1.0 / jnp.sqrt(deg), 0.0)
    return d_inv_sqrt[:, None] * a * d_inv_sqrt[None, :]


def prepare_adjacency(edge_index, num_nodes, n_pad):
    """bf16 padded Â; zero padding rows/cols so padded nodes never contribute."""
    adj = normalized_adjacency(edge_index, num_nodes).astype(jnp.bfloat16)
    p = n_pad - num_nodes
    return jnp.pad(adj, ((0, p), (0, p)))


def prepare_features(x, n_pad):
    n, f = x.shape
    f_pad = _round_up(f, _LANE)
    return jnp.pad(x.astype(jnp.bfloat16), ((0, n_pad - n), (0, f_pad - f)))


def pad_params(params):
    out = []
    for w, b in params:
        f_in, f_out = w.shape
        f_ip, f_op = _round_up(f_in, _LANE), _round_up(f_out, _LANE)
        w_p = jnp.pad(w, ((0, f_ip - f_in), (0, f_op - f_out))).astype(jnp.bfloat16)
        b_p = jnp.pad(b, (0, f_op - f_out)).astype(jnp.float32).reshape(1, f_op)
        out.append((w_p, b_p))
    return out


def basic_net_forward(x, edge_index, params, *,
                      force_streaming=False, force_stream_hw=False):
    """Forward pass of _BasicNet (inference mode: dropout is identity).

    Note: prepare_adjacency / prepare_features / pad_params are one-off
    preprocessing and can be cached by the caller for repeated forward calls.
    """
    n, _ = x.shape
    f_out_last = params[-1][0].shape[1]
    budget = _vmem_budget_bytes()

    n_pad_fused = _round_up(n, _LANE)
    use_fused = (not force_streaming) and _fused_fits(n_pad_fused, params, budget)
    n_pad = n_pad_fused if use_fused else _round_up(n, 512)

    adj_bf = prepare_adjacency(edge_index, n, n_pad)
    h = prepare_features(x, n_pad)
    pparams = pad_params(params)

    if use_fused:
        out = fused_stack(adj_bf, h, pparams, budget)
    else:
        tm, tk = _choose_agg_tiles(n_pad)
        n_layers = len(pparams)
        for i, (w_p, b_p) in enumerate(pparams):
            is_last = i == n_layers - 1
            f_ip, f_op = w_p.shape
            tm_ft = _choose_ft_tile(n_pad, f_ip, f_op, budget)
            hw = feature_transform(h, w_p, tm=tm_ft, vmem_limit=budget)
            hw_resident = (not force_stream_hw) and _hw_resident_fits(
                n_pad, f_op, tm, tk, budget)
            h = aggregate(
                adj_bf, hw, b_p,
                apply_relu=not is_last,
                out_dtype=jnp.float32 if is_last else jnp.bfloat16,
                tm=tm, tk=tk, hw_resident=hw_resident, vmem_limit=budget,
            )
        out = h

    return out[:n, :f_out_last]


# ----------------------------------------------------------------------------
# References
# ----------------------------------------------------------------------------
def reference_bf16(x, edge_index, params):
    """Same math with matching bf16 operand quantization (tight tolerance)."""
    adj_q = normalized_adjacency(edge_index, x.shape[0]).astype(jnp.bfloat16)
    h_q = x.astype(jnp.bfloat16)
    for i, (w, b) in enumerate(params):
        hw_q = jnp.dot(h_q, w.astype(jnp.bfloat16),
                       preferred_element_type=jnp.float32).astype(jnp.bfloat16)
        o = jnp.dot(adj_q, hw_q, preferred_element_type=jnp.float32) + b[None, :]
        h_q = jnp.maximum(o, 0.0).astype(jnp.bfloat16) if i < len(params) - 1 else o
    return h_q


def reference_f32(x, edge_index, params):
    """Full-f32 module math (loose bound on bf16 quantization error)."""
    adj = normalized_adjacency(edge_index, x.shape[0])
    h = x
    for i, (w, b) in enumerate(params):
        h = adj @ (h @ w) + b[None, :]
        if i < len(params) - 1:
            h = jnp.maximum(h, 0.0)
    return h


# ----------------------------------------------------------------------------
# Demo
# ----------------------------------------------------------------------------
if __name__ == "__main__":
    key = jax.random.PRNGKey(0)

    # --- small graph: exercises the fully fused single-call path ------------
    num_nodes, num_edges = 128, 512
    in_feats, n_hidden, n_classes, n_layers = 32, 32, 16, 2

    key, kx, ke, kp = jax.random.split(key, 4)
    x = jax.random.normal(kx, (num_nodes, in_feats), jnp.float32)
    edge_index = jax.random.randint(ke, (2, num_edges), 0, num_nodes, jnp.int32)
    params = init_params(kp, in_feats, n_hidden, n_classes, n_layers)

    out = basic_net_forward(x, edge_index, params)
    jax.block_until_ready(out)
    assert out.shape == (num_nodes, n_classes)
    assert jnp.allclose(out, reference_bf16(x, edge_index, params),
                        atol=1e-2, rtol=1e-2)
    assert jnp.allclose(out, reference_f32(x, edge_index, params),
                        atol=5e-2, rtol=5e-2)

    # --- streaming path (large tiles, HW VMEM-resident) and slab fallback ---
    num_nodes2, num_edges2 = 600, 4096
    key, kx2, ke2, kp2 = jax.random.split(key, 4)
    x2 = jax.random.normal(kx2, (num_nodes2, in_feats), jnp.float32)
    edge_index2 = jax.random.randint(ke2, (2, num_edges2), 0, num_nodes2,
                                     jnp.int32)
    params2 = init_params(kp2, in_feats, n_hidden, n_classes, n_layers)
    ref2 = reference_bf16(x2, edge_index2, params2)

    out2 = basic_net_forward(x2, edge_index2, params2, force_streaming=True)
    jax.block_until_ready(out2)
    assert out2.shape == (num_nodes2, n_classes)
    assert jnp.allclose(out2, ref2, atol=1e-2, rtol=1e-2)

    out3 = basic_net_forward(x2, edge_index2, params2,
                             force_streaming=True, force_stream_hw=True)
    jax.block_until_ready(out3)
    assert jnp.allclose(out3, ref2, atol=1e-2, rtol=1e-2)

    print("KERNEL_OK")
</pallas_src>

<mosaic_0001>
module attributes {stable_mosaic.version = 11 : i64} {
  func.func @_fused_stack_kernel(%arg0: memref<128x128xbf16, #tpu.memory_space<vmem>>, %arg1: memref<128x128xbf16, #tpu.memory_space<vmem>>, %arg2: memref<128x128xbf16, #tpu.memory_space<vmem>>, %arg3: memref<1x128xf32, #tpu.memory_space<vmem>>, %arg4: memref<128x128xbf16, #tpu.memory_space<vmem>>, %arg5: memref<1x128xf32, #tpu.memory_space<vmem>>, %arg6: memref<128x128xbf16, #tpu.memory_space<vmem>>, %arg7: memref<1x128xf32, #tpu.memory_space<vmem>>, %arg8: memref<128x128xf32, #tpu.memory_space<vmem>>) attributes {dimension_semantics = [], scalar_prefetch = 0 : i64, scratch_operands = 0 : i64, tpu.core_type = #tpu.core_type<tc>} {
    %c0 = arith.constant 0 : index
    %c0_0 = arith.constant 0 : index
    %0 = vector.load %arg0[%c0, %c0_0] : memref<128x128xbf16, #tpu.memory_space<vmem>>, vector<128x128xbf16>
    %c0_1 = arith.constant 0 : index
    %c0_2 = arith.constant 0 : index
    %1 = vector.load %arg1[%c0_1, %c0_2] : memref<128x128xbf16, #tpu.memory_space<vmem>>, vector<128x128xbf16>
    %c0_3 = arith.constant 0 : index
    %c0_4 = arith.constant 0 : index
    %2 = vector.load %arg2[%c0_3, %c0_4] : memref<128x128xbf16, #tpu.memory_space<vmem>>, vector<128x128xbf16>
    %cst = arith.constant dense<0.000000e+00> : vector<128x128xf32>
    %3 = tpu.matmul %1, %2, %cst {dimension_numbers = #tpu.dot_dimension_numbers<[1], [0], [0], [1], [0, 0, 1, 1], [], []>} : vector<128x128xbf16>, vector<128x128xbf16>, vector<128x128xf32> -> vector<128x128xf32>
    %4 = arith.truncf %3 : vector<128x128xf32> to vector<128x128xbf16>
    %cst_5 = arith.constant dense<0.000000e+00> : vector<128x128xf32>
    %5 = tpu.matmul %0, %4, %cst_5 {dimension_numbers = #tpu.dot_dimension_numbers<[1], [0], [0], [1], [0, 0, 1, 1], [], []>} : vector<128x128xbf16>, vector<128x128xbf16>, vector<128x128xf32> -> vector<128x128xf32>
    %c0_6 = arith.constant 0 : index
    %c0_7 = arith.constant 0 : index
    %6 = vector.load %arg3[%c0_6, %c0_7] : memref<1x128xf32, #tpu.memory_space<vmem>>, vector<1x128xf32>
    %7 = vector.broadcast %6 : vector<1x128xf32> to vector<128x128xf32>
    %8 = arith.addf %5, %7 : vector<128x128xf32>
    %cst_8 = arith.constant 0.000000e+00 : f32
    %9 = vector.broadcast %cst_8 : f32 to vector<128x128xf32>
    %10 = arith.maximumf %8, %9 : vector<128x128xf32>
    %11 = arith.truncf %10 : vector<128x128xf32> to vector<128x128xbf16>
    %c0_9 = arith.constant 0 : index
    %c0_10 = arith.constant 0 : index
    %12 = vector.load %arg4[%c0_9, %c0_10] : memref<128x128xbf16, #tpu.memory_space<vmem>>, vector<128x128xbf16>
    %cst_11 = arith.constant dense<0.000000e+00> : vector<128x128xf32>
    %13 = tpu.matmul %11, %12, %cst_11 {dimension_numbers = #tpu.dot_dimension_numbers<[1], [0], [0], [1], [0, 0, 1, 1], [], []>} : vector<128x128xbf16>, vector<128x128xbf16>, vector<128x128xf32> -> vector<128x128xf32>
    %14 = arith.truncf %13 : vector<128x128xf32> to vector<128x128xbf16>
    %cst_12 = arith.constant dense<0.000000e+00> : vector<128x128xf32>
    %15 = tpu.matmul %0, %14, %cst_12 {dimension_numbers = #tpu.dot_dimension_numbers<[1], [0], [0], [1], [0, 0, 1, 1], [], []>} : vector<128x128xbf16>, vector<128x128xbf16>, vector<128x128xf32> -> vector<128x128xf32>
    %c0_13 = arith.constant 0 : index
    %c0_14 = arith.constant 0 : index
    %16 = vector.load %arg5[%c0_13, %c0_14] : memref<1x128xf32, #tpu.memory_space<vmem>>, vector<1x128xf32>
    %17 = vector.broadcast %16 : vector<1x128xf32> to vector<128x128xf32>
    %18 = arith.addf %15, %17 : vector<128x128xf32>
    %cst_15 = arith.constant 0.000000e+00 : f32
    %19 = vector.broadcast %cst_15 : f32 to vector<128x128xf32>
    %20 = arith.maximumf %18, %19 : vector<128x128xf32>
    %21 = arith.truncf %20 : vector<128x128xf32> to vector<128x128xbf16>
    %c0_16 = arith.constant 0 : index
    %c0_17 = arith.constant 0 : index
    %22 = vector.load %arg6[%c0_16, %c0_17] : memref<128x128xbf16, #tpu.memory_space<vmem>>, vector<128x128xbf16>
    %cst_18 = arith.constant dense<0.000000e+00> : vector<128x128xf32>
    %23 = tpu.matmul %21, %22, %cst_18 {dimension_numbers = #tpu.dot_dimension_numbers<[1], [0], [0], [1], [0, 0, 1, 1], [], []>} : vector<128x128xbf16>, vector<128x128xbf16>, vector<128x128xf32> -> vector<128x128xf32>
    %24 = arith.truncf %23 : vector<128x128xf32> to vector<128x128xbf16>
    %cst_19 = arith.constant dense<0.000000e+00> : vector<128x128xf32>
    %25 = tpu.matmul %0, %24, %cst_19 {dimension_numbers = #tpu.dot_dimension_numbers<[1], [0], [0], [1], [0, 0, 1, 1], [], []>} : vector<128x128xbf16>, vector<128x128xbf16>, vector<128x128xf32> -> vector<128x128xf32>
    %c0_20 = arith.constant 0 : index
    %c0_21 = arith.constant 0 : index
    %26 = vector.load %arg7[%c0_20, %c0_21] : memref<1x128xf32, #tpu.memory_space<vmem>>, vector<1x128xf32>
    %27 = vector.broadcast %26 : vector<1x128xf32> to vector<128x128xf32>
    %28 = arith.addf %25, %27 : vector<128x128xf32>
    %c0_22 = arith.constant 0 : index
    %c0_23 = arith.constant 0 : index
    %29 = vector.load %arg8[%c0_22, %c0_23] : memref<128x128xf32, #tpu.memory_space<vmem>>, vector<128x128xf32>
    tpu.vector_store %arg8[%c0_22, %c0_23], %28 {strides = array<i32>} : memref<128x128xf32, #tpu.memory_space<vmem>>, vector<128x128xf32>,
    return
  }
}

</mosaic_0001>

<llo_original>
// kernel: tpu_custom_call.1
$region0: #{tpu_custom_call.1}
  #allocation0 [shape = 'u32[]', space=smem, size = 0x4, offset = 0x4, fixed_abs, tag = 'smem constant byte address 0x4 - core index']
  #allocation1 [shape = 'u32[144,128]{1,0:T(1,128)}', space=vmem, size = 0x12000, scoped, tag = 'internal scratch']
  %s0 = inlined_call_operand.hbm [shape: bf16[128,128], index: 0, kind: input, shape index: {}]
  %s1 = inlined_call_operand.hbm [shape: bf16[128,128], index: 1, kind: input, shape index: {}]
  %s2 = inlined_call_operand.hbm [shape: bf16[128,128], index: 2, kind: input, shape index: {}]
  %s3 = inlined_call_operand.vmem [shape: f32[1,128], index: 3, kind: input, shape index: {}]
  %s4 = inlined_call_operand.hbm [shape: bf16[128,128], index: 4, kind: input, shape index: {}]
  %s5 = inlined_call_operand.vmem [shape: f32[1,128], index: 5, kind: input, shape index: {}]
  %s6 = inlined_call_operand.hbm [shape: bf16[128,128], index: 6, kind: input, shape index: {}]
  %s7 = inlined_call_operand.vmem [shape: f32[1,128], index: 7, kind: input, shape index: {}]
  %s8 = inlined_call_operand.hbm [shape: f32[128,128], index: 8, kind: output, shape index: {}]
  %s9 = sld [smem:[#allocation0]]
  $region62: #{tpu_custom_call.1} parent=0
    _
  %s11 = ssub.s32 1, %s9
  %s12 = scalar_select 0, %s11, %s9
  $region1: #{tpu_custom_call.1} parent=0
    #allocation2 [shape = 'u8[32768]{0}', space=vmem, size = 0x8000, scoped, tag = 'input window, operand 0, single buffered']
    #allocation3 [shape = 's32[1]{0}', space=sflag, size = 0x4, scoped, tag = 'scoped memory for tpu_custom_call.1']
    #allocation4 [shape = 's32[1]{0}', space=sflag, size = 0x4, scoped, tag = 'scoped memory for tpu_custom_call.1']
    #allocation5 [shape = 'u8[32768]{0}', space=vmem, size = 0x8000, scoped, tag = 'input window, operand 1, single buffered']
    #allocation6 [shape = 's32[1]{0}', space=sflag, size = 0x4, scoped, tag = 'scoped memory for tpu_custom_call.1']
    #allocation7 [shape = 'u8[32768]{0}', space=vmem, size = 0x8000, scoped, tag = 'input window, operand 2, single buffered']
    #allocation8 [shape = 'u8[32768]{0}', space=vmem, size = 0x8000, scoped, tag = 'input window, operand 4, single buffered']
    #allocation9 [shape = 's32[1]{0}', space=sflag, size = 0x4, scoped, tag = 'scoped memory for tpu_custom_call.1']
    #allocation10 [shape = 'u8[32768]{0}', space=vmem, size = 0x8000, scoped, tag = 'input window, operand 6, single buffered']
    #allocation11 [shape = 'u8[65536]{0}', space=vmem, size = 0x10000, scoped, tag = 'output window, operand 0, single buffered']
    %13 = vsyncpa [#allocation3], 0
    %14 = vsyncpa [#allocation6], 0
    %15 = vsyncpa [#allocation9], 0
    %16 = vsyncpa [#allocation4], 0
    // Predicated region
    $region2: #{tpu_custom_call.1} parent=1 // pred_check
      _
    $region3: #{tpu_custom_call.1} parent=1 // pred_check_branch
      %18 = sbr.rel (0) target = $region5
    $region4: #{tpu_custom_call.1} parent=1 // pred_region
      %s20 = ssub.s32 1024, 1024
      %21 = vsyncadd [#allocation3], %s20
      %s22 = sshll.u32 [#allocation2], 4
      %s23 = int_to_ptr.vmem [resolvable:$true] %s22
      %28 = dma.hbm_to_vmem [thread:$0]  %s0, 1024, %s23, [#allocation3], 64, 64, 4
    $region5: #{tpu_custom_call.1} parent=1 // pred_fallthru
      _
    // Predicated region
    $region6: #{tpu_custom_call.1} parent=1 // pred_check
      _
    $region7: #{tpu_custom_call.1} parent=1 // pred_check_branch
      %30 = sbr.rel (0) target = $region9
    $region8: #{tpu_custom_call.1} parent=1 // pred_region
      %s32 = ssub.s32 1024, 1024
      %33 = vsyncadd [#allocation6], %s32
      %s34 = sshll.u32 [#allocation5], 4
      %s35 = int_to_ptr.vmem [resolvable:$true] %s34
      %40 = dma.hbm_to_vmem [thread:$0]  %s1, 1024, %s35, [#allocation6], 64, 64, 4
    $region9: #{tpu_custom_call.1} parent=1 // pred_fallthru
      _
    // Predicated region
    $region10: #{tpu_custom_call.1} parent=1 // pred_check
      _
    $region11: #{tpu_custom_call.1} parent=1 // pred_check_branch
      %42 = sbr.rel (0) target = $region13
    $region12: #{tpu_custom_call.1} parent=1 // pred_region
      %s44 = ssub.s32 1024, 1024
      %45 = vsyncadd [#allocation6], %s44
      %s46 = sshll.u32 [#allocation7], 4
      %s47 = int_to_ptr.vmem [resolvable:$true] %s46
      %52 = dma.hbm_to_vmem [thread:$0]  %s2, 1024, %s47, [#allocation6], 64, 64, 4
    $region13: #{tpu_custom_call.1} parent=1 // pred_fallthru
      _
    // Predicated region
    $region14: #{tpu_custom_call.1} parent=1 // pred_check
      _
    $region15: #{tpu_custom_call.1} parent=1 // pred_check_branch
      %54 = sbr.rel (0) target = $region17
    $region16: #{tpu_custom_call.1} parent=1 // pred_region
      _
    $region17: #{tpu_custom_call.1} parent=1 // pred_fallthru
      _
    // Predicated region
    $region18: #{tpu_custom_call.1} parent=1 // pred_check
      _
    $region19: #{tpu_custom_call.1} parent=1 // pred_check_branch
      %56 = sbr.rel (0) target = $region21
    $region20: #{tpu_custom_call.1} parent=1 // pred_region
      %s58 = ssub.s32 1024, 1024
      %59 = vsyncadd [#allocation9], %s58
      %s60 = sshll.u32 [#allocation8], 4
      %s61 = int_to_ptr.vmem [resolvable:$true] %s60
      %66 = dma.hbm_to_vmem [thread:$0]  %s4, 1024, %s61, [#allocation9], 64, 64, 4
    $region21: #{tpu_custom_call.1} parent=1 // pred_fallthru
      _
    // Predicated region
    $region22: #{tpu_custom_call.1} parent=1 // pred_check
      _
    $region23: #{tpu_custom_call.1} parent=1 // pred_check_branch
      %68 = sbr.rel (0) target = $region25
    $region24: #{tpu_custom_call.1} parent=1 // pred_region
      _
    $region25: #{tpu_custom_call.1} parent=1 // pred_fallthru
      _
    // Predicated region
    $region26: #{tpu_custom_call.1} parent=1 // pred_check
      _
    $region27: #{tpu_custom_call.1} parent=1 // pred_check_branch
      %70 = sbr.rel (0) target = $region29
    $region28: #{tpu_custom_call.1} parent=1 // pred_region
      %s72 = ssub.s32 1024, 1024
      %73 = vsyncadd [#allocation9], %s72
      %s74 = sshll.u32 [#allocation10], 4
      %s75 = int_to_ptr.vmem [resolvable:$true] %s74
      %80 = dma.hbm_to_vmem [thread:$0]  %s6, 1024, %s75, [#allocation9], 64, 64, 4
    $region29: #{tpu_custom_call.1} parent=1 // pred_fallthru
      _
    // Predicated region
    $region30: #{tpu_custom_call.1} parent=1 // pred_check
      _
    $region31: #{tpu_custom_call.1} parent=1 // pred_check_branch
      %82 = sbr.rel (0) target = $region33
    $region32: #{tpu_custom_call.1} parent=1 // pred_region
      _
    $region33: #{tpu_custom_call.1} parent=1 // pred_fallthru
      _
    // Predicated region
    $region34: #{tpu_custom_call.1} parent=1 // pred_check
      _
    $region35: #{tpu_custom_call.1} parent=1 // pred_check_branch
      %84 = sbr.rel (0) target = $region37
    $region36: #{tpu_custom_call.1} parent=1 // pred_region
      %85 = dma.done [#allocation3], 1024
    $region37: #{tpu_custom_call.1} parent=1 // pred_fallthru
      _
    // Predicated region
    $region38: #{tpu_custom_call.1} parent=1 // pred_check
      _
    $region39: #{tpu_custom_call.1} parent=1 // pred_check_branch
      %87 = sbr.rel (0) target = $region41
    $region40: #{tpu_custom_call.1} parent=1 // pred_region
      %88 = dma.done [#allocation6], 1024
    $region41: #{tpu_custom_call.1} parent=1 // pred_fallthru
      _
    // Predicated region
    $region42: #{tpu_custom_call.1} parent=1 // pred_check
      _
    $region43: #{tpu_custom_call.1} parent=1 // pred_check_branch
      %90 = sbr.rel (0) target = $region45
    $region44: #{tpu_custom_call.1} parent=1 // pred_region
      %91 = dma.done [#allocation6], 1024
    $region45: #{tpu_custom_call.1} parent=1 // pred_fallthru
      _
    // Predicated region
    $region46: #{tpu_custom_call.1} parent=1 // pred_check
      _
    $region47: #{tpu_custom_call.1} parent=1 // pred_check_branch
      %93 = sbr.rel (0) target = $region49
    $region48: #{tpu_custom_call.1} parent=1 // pred_region
      %94 = dma.done [#allocation9], 1024
    $region49: #{tpu_custom_call.1} parent=1 // pred_fallthru
      _
    // Predicated region
    $region50: #{tpu_custom_call.1} parent=1 // pred_check
      _
    $region51: #{tpu_custom_call.1} parent=1 // pred_check_branch
      %96 = sbr.rel (0) target = $region53
    $region52: #{tpu_custom_call.1} parent=1 // pred_region
      %97 = dma.done [#allocation9], 1024
    $region53: #{tpu_custom_call.1} parent=1 // pred_fallthru
      _
    %v99 = vld [vmem:[#allocation2] sm:$0xf]
    %v100 = vld [vmem:[#allocation2 + $0x4] sm:$0xf]
    %v101 = vld [vmem:[#allocation2 + $0x8] sm:$0xf]
    %v102 = vld [vmem:[#allocation2 + $0xc] sm:$0xf]
    %v103 = vld [vmem:[#allocation2 + $0x10] sm:$0xf]
    %v104 = vld [vmem:[#allocation2 + $0x14] sm:$0xf]
    %v105 = vld [vmem:[#allocation2 + $0x18] sm:$0xf]
    %v106 = vld [vmem:[#allocation2 + $0x1c] sm:$0xf]
    %v107 = vld [vmem:[#allocation2 + $0x20] sm:$0xf]
    %v108 = vld [vmem:[#allocation2 + $0x24] sm:$0xf]
    %v109 = vld [vmem:[#allocation2 + $0x28] sm:$0xf]
    %v110 = vld [vmem:[#allocation2 + $0x2c] sm:$0xf]
    %v111 = vld [vmem:[#allocation2 + $0x30] sm:$0xf]
    %v112 = vld [vmem:[#allocation2 + $0x34] sm:$0xf]
    %v113 = vld [vmem:[#allocation2 + $0x38] sm:$0xf]
    %v114 = vld [vmem:[#allocation2 + $0x3c] sm:$0xf]
    %v115 = vld [vmem:[#allocation5] sm:$0xf]
    %v116 = vld [vmem:[#allocation5 + $0x4] sm:$0xf]
    %v117 = vld [vmem:[#allocation5 + $0x8] sm:$0xf]
    %v118 = vld [vmem:[#allocation5 + $0xc] sm:$0xf]
    %v119 = vld [vmem:[#allocation5 + $0x10] sm:$0xf]
    %v120 = vld [vmem:[#allocation5 + $0x14] sm:$0xf]
    %v121 = vld [vmem:[#allocation5 + $0x18] sm:$0xf]
    %v122 = vld [vmem:[#allocation5 + $0x1c] sm:$0xf]
    %v123 = vld [vmem:[#allocation5 + $0x20] sm:$0xf]
    %v124 = vld [vmem:[#allocation5 + $0x24] sm:$0xf]
    %v125 = vld [vmem:[#allocation5 + $0x28] sm:$0xf]
    %v126 = vld [vmem:[#allocation5 + $0x2c] sm:$0xf]
    %v127 = vld [vmem:[#allocation5 + $0x30] sm:$0xf]
    %v128 = vld [vmem:[#allocation5 + $0x34] sm:$0xf]
    %v129 = vld [vmem:[#allocation5 + $0x38] sm:$0xf]
    %v130 = vld [vmem:[#allocation5 + $0x3c] sm:$0xf]
    %v131 = vld [vmem:[#allocation7] sm:$0xf]
    %v132 = vld [vmem:[#allocation7 + $0x4] sm:$0xf]
    %v133 = vld [vmem:[#allocation7 + $0x8] sm:$0xf]
    %v134 = vld [vmem:[#allocation7 + $0xc] sm:$0xf]
    %v135 = vld [vmem:[#allocation7 + $0x10] sm:$0xf]
    %v136 = vld [vmem:[#allocation7 + $0x14] sm:$0xf]
    %v137 = vld [vmem:[#allocation7 + $0x18] sm:$0xf]
    %v138 = vld [vmem:[#allocation7 + $0x1c] sm:$0xf]
    %v139 = vld [vmem:[#allocation7 + $0x20] sm:$0xf]
    %v140 = vld [vmem:[#allocation7 + $0x24] sm:$0xf]
    %v141 = vld [vmem:[#allocation7 + $0x28] sm:$0xf]
    %v142 = vld [vmem:[#allocation7 + $0x2c] sm:$0xf]
    %v143 = vld [vmem:[#allocation7 + $0x30] sm:$0xf]
    %v144 = vld [vmem:[#allocation7 + $0x34] sm:$0xf]
    %v145 = vld [vmem:[#allocation7 + $0x38] sm:$0xf]
    %v146 = vld [vmem:[#allocation7 + $0x3c] sm:$0xf]
    %v163 = vunpack.c.l.b16 %v115
    %v164 = vunpack.c.l.b16 %v116
    %v165 = vunpack.c.l.b16 %v117
    %v166 = vunpack.c.l.b16 %v118
    %v167 = vunpack.c.l.b16 %v119
    %v168 = vunpack.c.l.b16 %v120
    %v169 = vunpack.c.l.b16 %v121
    %v170 = vunpack.c.l.b16 %v122
    %v171 = vunpack.c.l.b16 %v123
    %v172 = vunpack.c.l.b16 %v124
    %v173 = vunpack.c.l.b16 %v125
    %v174 = vunpack.c.l.b16 %v126
    %v175 = vunpack.c.l.b16 %v127
    %v176 = vunpack.c.l.b16 %v128
    %v177 = vunpack.c.l.b16 %v129
    %v178 = vunpack.c.l.b16 %v130
    %v179 = vpack.c.b16 %v164, %v163
    %v180 = vpack.c.b16 %v166, %v165
    %v181 = vpack.c.b16 %v168, %v167
    %v182 = vpack.c.b16 %v170, %v169
    %v183 = vpack.c.b16 %v172, %v171
    %v184 = vpack.c.b16 %v174, %v173
    %v185 = vpack.c.b16 %v176, %v175
    %v186 = vpack.c.b16 %v178, %v177
    %v211 = vunpack.c.l.b16 %v131
    %v212 = vunpack.c.l.b16 %v132
    %v213 = vunpack.c.l.b16 %v133
    %v214 = vunpack.c.l.b16 %v134
    %v215 = vunpack.c.l.b16 %v135
    %v216 = vunpack.c.l.b16 %v136
    %v217 = vunpack.c.l.b16 %v137
    %v218 = vunpack.c.l.b16 %v138
    %v219 = vunpack.c.l.b16 %v139
    %v220 = vunpack.c.l.b16 %v140
    %v221 = vunpack.c.l.b16 %v141
    %v222 = vunpack.c.l.b16 %v142
    %v223 = vunpack.c.l.b16 %v143
    %v224 = vunpack.c.l.b16 %v144
    %v225 = vunpack.c.l.b16 %v145
    %v226 = vunpack.c.l.b16 %v146
    %v227 = vpack.c.b16 %v212, %v211
    %v228 = vpack.c.b16 %v214, %v213
    %v229 = vpack.c.b16 %v216, %v215
    %v230 = vpack.c.b16 %v218, %v217
    %v231 = vpack.c.b16 %v220, %v219
    %v232 = vpack.c.b16 %v222, %v221
    %v233 = vpack.c.b16 %v224, %v223
    %v234 = vpack.c.b16 %v226, %v225
    %243 = vmatprep.subr.bf16.mxu0 0
    %244 = vmatpush1.bf16.msra.mxu0 %v227
    %245 = vmatprep.subr.bf16.mxu0 0
    %246 = vmatpush1.bf16.msra.mxu0 %v228
    %247 = vmatprep.subr.bf16.mxu0 0
    %248 = vmatpush1.bf16.msra.mxu0 %v229
    %249 = vmatprep.subr.bf16.mxu0 0
    %250 = vmatpush1.bf16.msra.mxu0 %v230
    %251 = vmatprep.subr.bf16.mxu0 0
    %252 = vmatpush1.bf16.msra.mxu0 %v231
    %253 = vmatprep.subr.bf16.mxu0 0
    %254 = vmatpush1.bf16.msra.mxu0 %v232
    %255 = vmatprep.subr.bf16.mxu0 0
    %256 = vmatpush1.bf16.msra.mxu0 %v233
    %257 = vmatprep.subr.bf16.mxu0 0
    %258 = vmatpush1.bf16.msra.mxu0 %v234
    %259 = vmatprep.subr.bf16.mxu0 0
    %260 = vmatpush1.bf16.msra.mxu0 0
    %261 = vmatprep.subr.bf16.mxu0 0
    %262 = vmatpush1.bf16.msra.mxu0 0
    %263 = vmatprep.subr.bf16.mxu0 0
    %264 = vmatpush1.bf16.msra.mxu0 0
    %265 = vmatprep.subr.bf16.mxu0 0
    %266 = vmatpush1.bf16.msra.mxu0 0
    %267 = vmatprep.subr.bf16.mxu0 0
    %268 = vmatpush1.bf16.msra.mxu0 0
    %269 = vmatprep.subr.bf16.mxu0 0
    %270 = vmatpush1.bf16.msra.mxu0 0
    %271 = vmatprep.subr.bf16.mxu0 0
    %272 = vmatpush1.bf16.msra.mxu0 0
    %273 = vmatprep.subr.bf16.mxu0 0
    %274 = vmatpush1.bf16.msra.mxu0 0
    %275 = vmatprep.mubr.bf16.mxu0 0
    %276 = vmatmul.mubr.bf16.gmra.mrb[0].mxu0 %v179
    %v277 = vpop.f32.mrb[0].mxu0
    %v278 = vadd.f32 0.0, %v277
    %v279 = vpop.f32.mrb[0].mxu0
    %v280 = vpop.f32.mrb[0].mxu0
    %v281 = vadd.f32 0.0, %v280
    %v282 = vpop.f32.mrb[0].mxu0
    %283 = vmatprep.mubr.bf16.mxu0 0
    %284 = vmatmul.mubr.bf16.gmra.mrb[0].mxu0 %v180
    %v285 = vpop.f32.mrb[0].mxu0
    %v286 = vadd.f32 0.0, %v285
    %v287 = vpop.f32.mrb[0].mxu0
    %v288 = vpop.f32.mrb[0].mxu0
    %v289 = vadd.f32 0.0, %v288
    %v290 = vpop.f32.mrb[0].mxu0
    %291 = vmatprep.mubr.bf16.mxu0 0
    %292 = vmatmul.mubr.bf16.gmra.mrb[0].mxu0 %v181
    %v293 = vpop.f32.mrb[0].mxu0
    %v294 = vadd.f32 0.0, %v293
    %v295 = vpop.f32.mrb[0].mxu0
    %v296 = vpop.f32.mrb[0].mxu0
    %v297 = vadd.f32 0.0, %v296
    %v298 = vpop.f32.mrb[0].mxu0
    %299 = vmatprep.mubr.bf16.mxu0 0
    %300 = vmatmul.mubr.bf16.gmra.mrb[0].mxu0 %v182
    %v301 = vpop.f32.mrb[0].mxu0
    %v302 = vadd.f32 0.0, %v301
    %v303 = vpop.f32.mrb[0].mxu0
    %v304 = vpop.f32.mrb[0].mxu0
    %v305 = vadd.f32 0.0, %v304
    %v306 = vpop.f32.mrb[0].mxu0
    %307 = vmatprep.mubr.bf16.mxu0 0
    %308 = vmatmul.mubr.bf16.gmra.mrb[0].mxu0 %v183
    %v309 = vpop.f32.mrb[0].mxu0
    %v310 = vadd.f32 0.0, %v309
    %v311 = vpop.f32.mrb[0].mxu0
    %v312 = vpop.f32.mrb[0].mxu0
    %v313 = vadd.f32 0.0, %v312
    %v314 = vpop.f32.mrb[0].mxu0
    %315 = vmatprep.mubr.bf16.mxu0 0
    %316 = vmatmul.mubr.bf16.gmra.mrb[0].mxu0 %v184
    %v317 = vpop.f32.mrb[0].mxu0
    %v318 = vadd.f32 0.0, %v317
    %v319 = vpop.f32.mrb[0].mxu0
    %v320 = vpop.f32.mrb[0].mxu0
    %v321 = vadd.f32 0.0, %v320
    %v322 = vpop.f32.mrb[0].mxu0
    %323 = vmatprep.mubr.bf16.mxu0 0
    %324 = vmatmul.mubr.bf16.gmra.mrb[0].mxu0 %v185
    %v325 = vpop.f32.mrb[0].mxu0
    %v326 = vadd.f32 0.0, %v325
    %v327 = vpop.f32.mrb[0].mxu0
    %v328 = vpop.f32.mrb[0].mxu0
    %v329 = vadd.f32 0.0, %v328
    %v330 = vpop.f32.mrb[0].mxu0
    %331 = vmatprep.mubr.bf16.mxu0 0
    %332 = vmatmul.mubr.bf16.gmra.mrb[0].mxu0 %v186
    %v333 = vpop.f32.mrb[0].mxu0
    %v334 = vadd.f32 0.0, %v333
    %v335 = vpop.f32.mrb[0].mxu0
    %v336 = vpop.f32.mrb[0].mxu0
    %v337 = vadd.f32 0.0, %v336
    %v338 = vpop.f32.mrb[0].mxu0
    %339 = vdwg.mxu0
    %v340 = vpack.c.bf16 %v281, %v278
    %v341 = vpack.c.bf16 %v289, %v286
    %v342 = vpack.c.bf16 %v297, %v294
    %v343 = vpack.c.bf16 %v305, %v302
    %v344 = vpack.c.bf16 %v313, %v310
    %v345 = vpack.c.bf16 %v321, %v318
    %v346 = vpack.c.bf16 %v329, %v326
    %v347 = vpack.c.bf16 %v337, %v334
    %v348 = vld [vmem:[%s3] sm:$0x1]
    %v350 = vlaneseq
    %v351 = vshrl.u32 %v350, 7
    %v352 = vsub.s32 0, %v351
    %v353 = vrot.slane %v348, %v352
    %v371 = vunpack.c.l.b16 %v99
    %v372 = vunpack.c.l.b16 %v100
    %v373 = vunpack.c.l.b16 %v101
    %v374 = vunpack.c.l.b16 %v102
    %v375 = vunpack.c.l.b16 %v103
    %v376 = vunpack.c.l.b16 %v104
    %v377 = vunpack.c.l.b16 %v105
    %v378 = vunpack.c.l.b16 %v106
    %v379 = vunpack.c.l.b16 %v107
    %v380 = vunpack.c.l.b16 %v108
    %v381 = vunpack.c.l.b16 %v109
    %v382 = vunpack.c.l.b16 %v110
    %v383 = vunpack.c.l.b16 %v111
    %v384 = vunpack.c.l.b16 %v112
    %v385 = vunpack.c.l.b16 %v113
    %v386 = vunpack.c.l.b16 %v114
    %v387 = vpack.c.b16 %v372, %v371
    %v388 = vpack.c.b16 %v374, %v373
    %v389 = vpack.c.b16 %v376, %v375
    %v390 = vpack.c.b16 %v378, %v377
    %v391 = vpack.c.b16 %v380, %v379
    %v392 = vpack.c.b16 %v382, %v381
    %v393 = vpack.c.b16 %v384, %v383
    %v394 = vpack.c.b16 %v386, %v385
    %403 = vmatprep.subr.bf16.mxu0 0
    %404 = vmatpush1.bf16.msra.mxu0 %v340
    %405 = vmatprep.subr.bf16.mxu0 0
    %406 = vmatpush1.bf16.msra.mxu0 %v341
    %407 = vmatprep.subr.bf16.mxu0 0
    %408 = vmatpush1.bf16.msra.mxu0 %v342
    %409 = vmatprep.subr.bf16.mxu0 0
    %410 = vmatpush1.bf16.msra.mxu0 %v343
    %411 = vmatprep.subr.bf16.mxu0 0
    %412 = vmatpush1.bf16.msra.mxu0 %v344
    %413 = vmatprep.subr.bf16.mxu0 0
    %414 = vmatpush1.bf16.msra.mxu0 %v345
    %415 = vmatprep.subr.bf16.mxu0 0
    %416 = vmatpush1.bf16.msra.mxu0 %v346
    %417 = vmatprep.subr.bf16.mxu0 0
    %418 = vmatpush1.bf16.msra.mxu0 %v347
    %419 = vmatprep.subr.bf16.mxu0 0
    %420 = vmatpush1.bf16.msra.mxu0 0
    %421 = vmatprep.subr.bf16.mxu0 0
    %422 = vmatpush1.bf16.msra.mxu0 0
    %423 = vmatprep.subr.bf16.mxu0 0
    %424 = vmatpush1.bf16.msra.mxu0 0
    %425 = vmatprep.subr.bf16.mxu0 0
    %426 = vmatpush1.bf16.msra.mxu0 0
    %427 = vmatprep.subr.bf16.mxu0 0
    %428 = vmatpush1.bf16.msra.mxu0 0
    %429 = vmatprep.subr.bf16.mxu0 0
    %430 = vmatpush1.bf16.msra.mxu0 0
    %431 = vmatprep.subr.bf16.mxu0 0
    %432 = vmatpush1.bf16.msra.mxu0 0
    %433 = vmatprep.subr.bf16.mxu0 0
    %434 = vmatpush1.bf16.msra.mxu0 0
    %435 = vmatprep.mubr.bf16.mxu0 0
    %436 = vmatmul.mubr.bf16.gmra.mrb[0].mxu0 %v387
    %v437 = vpop.f32.mrb[0].mxu0
    %v438 = vadd.f32 %v353, %v437
    %v439 = vpop.f32.mrb[0].mxu0
    %v440 = vpop.f32.mrb[0].mxu0
    %v441 = vadd.f32 %v353, %v440
    %v442 = vpop.f32.mrb[0].mxu0
    %443 = vmatprep.mubr.bf16.mxu0 0
    %444 = vmatmul.mubr.bf16.gmra.mrb[0].mxu0 %v388
    %v445 = vpop.f32.mrb[0].mxu0
    %v446 = vadd.f32 %v353, %v445
    %v447 = vpop.f32.mrb[0].mxu0
    %v448 = vpop.f32.mrb[0].mxu0
    %v449 = vadd.f32 %v353, %v448
    %v450 = vpop.f32.mrb[0].mxu0
    %451 = vmatprep.mubr.bf16.mxu0 0
    %452 = vmatmul.mubr.bf16.gmra.mrb[0].mxu0 %v389
    %v453 = vpop.f32.mrb[0].mxu0
    %v454 = vadd.f32 %v353, %v453
    %v455 = vpop.f32.mrb[0].mxu0
    %v456 = vpop.f32.mrb[0].mxu0
    %v457 = vadd.f32 %v353, %v456
    %v458 = vpop.f32.mrb[0].mxu0
    %459 = vmatprep.mubr.bf16.mxu0 0
    %460 = vmatmul.mubr.bf16.gmra.mrb[0].mxu0 %v390
    %v461 = vpop.f32.mrb[0].mxu0
    %v462 = vadd.f32 %v353, %v461
    %v463 = vpop.f32.mrb[0].mxu0
    %v464 = vpop.f32.mrb[0].mxu0
    %v465 = vadd.f32 %v353, %v464
    %v466 = vpop.f32.mrb[0].mxu0
    %467 = vmatprep.mubr.bf16.mxu0 0
    %468 = vmatmul.mubr.bf16.gmra.mrb[0].mxu0 %v391
    %v469 = vpop.f32.mrb[0].mxu0
    %v470 = vadd.f32 %v353, %v469
    %v471 = vpop.f32.mrb[0].mxu0
    %v472 = vpop.f32.mrb[0].mxu0
    %v473 = vadd.f32 %v353, %v472
    %v474 = vpop.f32.mrb[0].mxu0
    %475 = vmatprep.mubr.bf16.mxu0 0
    %476 = vmatmul.mubr.bf16.gmra.mrb[0].mxu0 %v392
    %v477 = vpop.f32.mrb[0].mxu0
    %v478 = vadd.f32 %v353, %v477
    %v479 = vpop.f32.mrb[0].mxu0
    %v480 = vpop.f32.mrb[0].mxu0
    %v481 = vadd.f32 %v353, %v480
    %v482 = vpop.f32.mrb[0].mxu0
    %483 = vmatprep.mubr.bf16.mxu0 0
    %484 = vmatmul.mubr.bf16.gmra.mrb[0].mxu0 %v393
    %v485 = vpop.f32.mrb[0].mxu0
    %v486 = vadd.f32 %v353, %v485
    %v487 = vpop.f32.mrb[0].mxu0
    %v488 = vpop.f32.mrb[0].mxu0
    %v489 = vadd.f32 %v353, %v488
    %v490 = vpop.f32.mrb[0].mxu0
    %491 = vmatprep.mubr.bf16.mxu0 0
    %492 = vmatmul.mubr.bf16.gmra.mrb[0].mxu0 %v394
    %v493 = vpop.f32.mrb[0].mxu0
    %v494 = vadd.f32 %v353, %v493
    %v495 = vpop.f32.mrb[0].mxu0
    %v496 = vpop.f32.mrb[0].mxu0
    %v497 = vadd.f32 %v353, %v496
    %v498 = vpop.f32.mrb[0].mxu0
    %499 = vdwg.mxu0
    %v500 = vmax.f32 %v438, 0.0
    %v501 = vmax.f32 %v441, 0.0
    %v502 = vmax.f32 %v446, 0.0
    %v503 = vmax.f32 %v449, 0.0
    %v504 = vmax.f32 %v454, 0.0
    %v505 = vmax.f32 %v457, 0.0
    %v506 = vmax.f32 %v462, 0.0
    %v507 = vmax.f32 %v465, 0.0
    %v508 = vmax.f32 %v470, 0.0
    %v509 = vmax.f32 %v473, 0.0
    %v510 = vmax.f32 %v478, 0.0
    %v511 = vmax.f32 %v481, 0.0
    %v512 = vmax.f32 %v486, 0.0
    %v513 = vmax.f32 %v489, 0.0
    %v514 = vmax.f32 %v494, 0.0
    %v515 = vmax.f32 %v497, 0.0
    %v516 = vpack.c.bf16 %v501, %v500
    %v517 = vpack.c.bf16 %v503, %v502
    %v518 = vpack.c.bf16 %v505, %v504
    %v519 = vpack.c.bf16 %v507, %v506
    %v520 = vpack.c.bf16 %v509, %v508
    %v521 = vpack.c.bf16 %v511, %v510
    %v522 = vpack.c.bf16 %v513, %v512
    %v523 = vpack.c.bf16 %v515, %v514
    %v524 = vld [vmem:[#allocation8] sm:$0xf]
    %v525 = vld [vmem:[#allocation8 + $0x4] sm:$0xf]
    %v526 = vld [vmem:[#allocation8 + $0x8] sm:$0xf]
    %v527 = vld [vmem:[#allocation8 + $0xc] sm:$0xf]
    %v528 = vld [vmem:[#allocation8 + $0x10] sm:$0xf]
    %v529 = vld [vmem:[#allocation8 + $0x14] sm:$0xf]
    %v530 = vld [vmem:[#allocation8 + $0x18] sm:$0xf]
    %v531 = vld [vmem:[#allocation8 + $0x1c] sm:$0xf]
    %v532 = vld [vmem:[#allocation8 + $0x20] sm:$0xf]
    %v533 = vld [vmem:[#allocation8 + $0x24] sm:$0xf]
    %v534 = vld [vmem:[#allocation8 + $0x28] sm:$0xf]
    %v535 = vld [vmem:[#allocation8 + $0x2c] sm:$0xf]
    %v536 = vld [vmem:[#allocation8 + $0x30] sm:$0xf]
    %v537 = vld [vmem:[#allocation8 + $0x34] sm:$0xf]
    %v538 = vld [vmem:[#allocation8 + $0x38] sm:$0xf]
    %v539 = vld [vmem:[#allocation8 + $0x3c] sm:$0xf]
    %v556 = vunpack.c.l.b16 %v524
    %v557 = vunpack.c.l.b16 %v525
    %v558 = vunpack.c.l.b16 %v526
    %v559 = vunpack.c.l.b16 %v527
    %v560 = vunpack.c.l.b16 %v528
    %v561 = vunpack.c.l.b16 %v529
    %v562 = vunpack.c.l.b16 %v530
    %v563 = vunpack.c.l.b16 %v531
    %v564 = vunpack.c.l.b16 %v532
    %v565 = vunpack.c.l.b16 %v533
    %v566 = vunpack.c.l.b16 %v534
    %v567 = vunpack.c.l.b16 %v535
    %v568 = vunpack.c.l.b16 %v536
    %v569 = vunpack.c.l.b16 %v537
    %v570 = vunpack.c.l.b16 %v538
    %v571 = vunpack.c.l.b16 %v539
    %v572 = vpack.c.b16 %v557, %v556
    %v573 = vpack.c.b16 %v559, %v558
    %v574 = vpack.c.b16 %v561, %v560
    %v575 = vpack.c.b16 %v563, %v562
    %v576 = vpack.c.b16 %v565, %v564
    %v577 = vpack.c.b16 %v567, %v566
    %v578 = vpack.c.b16 %v569, %v568
    %v579 = vpack.c.b16 %v571, %v570
    %588 = vmatprep.subr.bf16.mxu0 0
    %589 = vmatpush1.bf16.msra.mxu0 %v572
    %590 = vmatprep.subr.bf16.mxu0 0
    %591 = vmatpush1.bf16.msra.mxu0 %v573
    %592 = vmatprep.subr.bf16.mxu0 0
    %593 = vmatpush1.bf16.msra.mxu0 %v574
    %594 = vmatprep.subr.bf16.mxu0 0
    %595 = vmatpush1.bf16.msra.mxu0 %v575
    %596 = vmatprep.subr.bf16.mxu0 0
    %597 = vmatpush1.bf16.msra.mxu0 %v576
    %598 = vmatprep.subr.bf16.mxu0 0
    %599 = vmatpush1.bf16.msra.mxu0 %v577
    %600 = vmatprep.subr.bf16.mxu0 0
    %601 = vmatpush1.bf16.msra.mxu0 %v578
    %602 = vmatprep.subr.bf16.mxu0 0
    %603 = vmatpush1.bf16.msra.mxu0 %v579
    %604 = vmatprep.subr.bf16.mxu0 0
    %605 = vmatpush1.bf16.msra.mxu0 0
    %606 = vmatprep.subr.bf16.mxu0 0
    %607 = vmatpush1.bf16.msra.mxu0 0
    %608 = vmatprep.subr.bf16.mxu0 0
    %609 = vmatpush1.bf16.msra.mxu0 0
    %610 = vmatprep.subr.bf16.mxu0 0
    %611 = vmatpush1.bf16.msra.mxu0 0
    %612 = vmatprep.subr.bf16.mxu0 0
    %613 = vmatpush1.bf16.msra.mxu0 0
    %614 = vmatprep.subr.bf16.mxu0 0
    %615 = vmatpush1.bf16.msra.mxu0 0
    %616 = vmatprep.subr.bf16.mxu0 0
    %617 = vmatpush1.bf16.msra.mxu0 0
    %618 = vmatprep.subr.bf16.mxu0 0
    %619 = vmatpush1.bf16.msra.mxu0 0
    %620 = vmatprep.mubr.bf16.mxu0 0
    %621 = vmatmul.mubr.bf16.gmra.mrb[0].mxu0 %v516
    %v622 = vpop.f32.mrb[0].mxu0
    %v623 = vadd.f32 0.0, %v622
    %v624 = vpop.f32.mrb[0].mxu0
    %v625 = vpop.f32.mrb[0].mxu0
    %v626 = vadd.f32 0.0, %v625
    %v627 = vpop.f32.mrb[0].mxu0
    %628 = vmatprep.mubr.bf16.mxu0 0
    %629 = vmatmul.mubr.bf16.gmra.mrb[0].mxu0 %v517
    %v630 = vpop.f32.mrb[0].mxu0
    %v631 = vadd.f32 0.0, %v630
    %v632 = vpop.f32.mrb[0].mxu0
    %v633 = vpop.f32.mrb[0].mxu0
    %v634 = vadd.f32 0.0, %v633
    %v635 = vpop.f32.mrb[0].mxu0
    %636 = vmatprep.mubr.bf16.mxu0 0
    %637 = vmatmul.mubr.bf16.gmra.mrb[0].mxu0 %v518
    %v638 = vpop.f32.mrb[0].mxu0
    %v639 = vadd.f32 0.0, %v638
    %v640 = vpop.f32.mrb[0].mxu0
    %v641 = vpop.f32.mrb[0].mxu0
    %v642 = vadd.f32 0.0, %v641
    %v643 = vpop.f32.mrb[0].mxu0
    %644 = vmatprep.mubr.bf16.mxu0 0
    %645 = vmatmul.mubr.bf16.gmra.mrb[0].mxu0 %v519
    %v646 = vpop.f32.mrb[0].mxu0
    %v647 = vadd.f32 0.0, %v646
    %v648 = vpop.f32.mrb[0].mxu0
    %v649 = vpop.f32.mrb[0].mxu0
    %v650 = vadd.f32 0.0, %v649
    %v651 = vpop.f32.mrb[0].mxu0
    %652 = vmatprep.mubr.bf16.mxu0 0
    %653 = vmatmul.mubr.bf16.gmra.mrb[0].mxu0 %v520
    %v654 = vpop.f32.mrb[0].mxu0
    %v655 = vadd.f32 0.0, %v654
    %v656 = vpop.f32.mrb[0].mxu0
    %v657 = vpop.f32.mrb[0].mxu0
    %v658 = vadd.f32 0.0, %v657
    %v659 = vpop.f32.mrb[0].mxu0
    %660 = vmatprep.mubr.bf16.mxu0 0
    %661 = vmatmul.mubr.bf16.gmra.mrb[0].mxu0 %v521
    %v662 = vpop.f32.mrb[0].mxu0
    %v663 = vadd.f32 0.0, %v662
    %v664 = vpop.f32.mrb[0].mxu0
    %v665 = vpop.f32.mrb[0].mxu0
    %v666 = vadd.f32 0.0, %v665
    %v667 = vpop.f32.mrb[0].mxu0
    %668 = vmatprep.mubr.bf16.mxu0 0
    %669 = vmatmul.mubr.bf16.gmra.mrb[0].mxu0 %v522
    %v670 = vpop.f32.mrb[0].mxu0
    %v671 = vadd.f32 0.0, %v670
    %v672 = vpop.f32.mrb[0].mxu0
    %v673 = vpop.f32.mrb[0].mxu0
    %v674 = vadd.f32 0.0, %v673
    %v675 = vpop.f32.mrb[0].mxu0
    %676 = vmatprep.mubr.bf16.mxu0 0
    %677 = vmatmul.mubr.bf16.gmra.mrb[0].mxu0 %v523
    %v678 = vpop.f32.mrb[0].mxu0
    %v679 = vadd.f32 0.0, %v678
    %v680 = vpop.f32.mrb[0].mxu0
    %v681 = vpop.f32.mrb[0].mxu0
    %v682 = vadd.f32 0.0, %v681
    %v683 = vpop.f32.mrb[0].mxu0
    %684 = vdwg.mxu0
    %v685 = vpack.c.bf16 %v626, %v623
    %v686 = vpack.c.bf16 %v634, %v631
    %v687 = vpack.c.bf16 %v642, %v639
    %v688 = vpack.c.bf16 %v650, %v647
    %v689 = vpack.c.bf16 %v658, %v655
    %v690 = vpack.c.bf16 %v666, %v663
    %v691 = vpack.c.bf16 %v674, %v671
    %v692 = vpack.c.bf16 %v682, %v679
    %v693 = vld [vmem:[%s5] sm:$0x1]
    %v695 = vlaneseq
    %v696 = vshrl.u32 %v695, 7
    %v697 = vsub.s32 0, %v696
    %v698 = vrot.slane %v693, %v697
    %700 = vmatprep.subr.bf16.mxu0 0
    %701 = vmatpush1.bf16.msra.mxu0 %v685
    %702 = vmatprep.subr.bf16.mxu0 0
    %703 = vmatpush1.bf16.msra.mxu0 %v686
    %704 = vmatprep.subr.bf16.mxu0 0
    %705 = vmatpush1.bf16.msra.mxu0 %v687
    %706 = vmatprep.subr.bf16.mxu0 0
    %707 = vmatpush1.bf16.msra.mxu0 %v688
    %708 = vmatprep.subr.bf16.mxu0 0
    %709 = vmatpush1.bf16.msra.mxu0 %v689
    %710 = vmatprep.subr.bf16.mxu0 0
    %711 = vmatpush1.bf16.msra.mxu0 %v690
    %712 = vmatprep.subr.bf16.mxu0 0
    %713 = vmatpush1.bf16.msra.mxu0 %v691
    %714 = vmatprep.subr.bf16.mxu0 0
    %715 = vmatpush1.bf16.msra.mxu0 %v692
    %716 = vmatprep.subr.bf16.mxu0 0
    %717 = vmatpush1.bf16.msra.mxu0 0
    %718 = vmatprep.subr.bf16.mxu0 0
    %719 = vmatpush1.bf16.msra.mxu0 0
    %720 = vmatprep.subr.bf16.mxu0 0
    %721 = vmatpush1.bf16.msra.mxu0 0
    %722 = vmatprep.subr.bf16.mxu0 0
    %723 = vmatpush1.bf16.msra.mxu0 0
    %724 = vmatprep.subr.bf16.mxu0 0
    %725 = vmatpush1.bf16.msra.mxu0 0
    %726 = vmatprep.subr.bf16.mxu0 0
    %727 = vmatpush1.bf16.msra.mxu0 0
    %728 = vmatprep.subr.bf16.mxu0 0
    %729 = vmatpush1.bf16.msra.mxu0 0
    %730 = vmatprep.subr.bf16.mxu0 0
    %731 = vmatpush1.bf16.msra.mxu0 0
    %732 = vmatprep.mubr.bf16.mxu0 0
    %733 = vmatmul.mubr.bf16.gmra.mrb[0].mxu0 %v387
    %v734 = vpop.f32.mrb[0].mxu0
    %v735 = vadd.f32 %v698, %v734
    %v736 = vpop.f32.mrb[0].mxu0
    %v737 = vpop.f32.mrb[0].mxu0
    %v738 = vadd.f32 %v698, %v737
    %v739 = vpop.f32.mrb[0].mxu0
    %740 = vmatprep.mubr.bf16.mxu0 0
    %741 = vmatmul.mubr.bf16.gmra.mrb[0].mxu0 %v388
    %v742 = vpop.f32.mrb[0].mxu0
    %v743 = vadd.f32 %v698, %v742
    %v744 = vpop.f32.mrb[0].mxu0
    %v745 = vpop.f32.mrb[0].mxu0
    %v746 = vadd.f32 %v698, %v745
    %v747 = vpop.f32.mrb[0].mxu0
    %748 = vmatprep.mubr.bf16.mxu0 0
    %749 = vmatmul.mubr.bf16.gmra.mrb[0].mxu0 %v389
    %v750 = vpop.f32.mrb[0].mxu0
    %v751 = vadd.f32 %v698, %v750
    %v752 = vpop.f32.mrb[0].mxu0
    %v753 = vpop.f32.mrb[0].mxu0
    %v754 = vadd.f32 %v698, %v753
    %v755 = vpop.f32.mrb[0].mxu0
    %756 = vmatprep.mubr.bf16.mxu0 0
    %757 = vmatmul.mubr.bf16.gmra.mrb[0].mxu0 %v390
    %v758 = vpop.f32.mrb[0].mxu0
    %v759 = vadd.f32 %v698, %v758
    %v760 = vpop.f32.mrb[0].mxu0
    %v761 = vpop.f32.mrb[0].mxu0
    %v762 = vadd.f32 %v698, %v761
    %v763 = vpop.f32.mrb[0].mxu0
    %764 = vmatprep.mubr.bf16.mxu0 0
    %765 = vmatmul.mubr.bf16.gmra.mrb[0].mxu0 %v391
    %v766 = vpop.f32.mrb[0].mxu0
    %v767 = vadd.f32 %v698, %v766
    %v768 = vpop.f32.mrb[0].mxu0
    %v769 = vpop.f32.mrb[0].mxu0
    %v770 = vadd.f32 %v698, %v769
    %v771 = vpop.f32.mrb[0].mxu0
    %772 = vmatprep.mubr.bf16.mxu0 0
    %773 = vmatmul.mubr.bf16.gmra.mrb[0].mxu0 %v392
    %v774 = vpop.f32.mrb[0].mxu0
    %v775 = vadd.f32 %v698, %v774
    %v776 = vpop.f32.mrb[0].mxu0
    %v777 = vpop.f32.mrb[0].mxu0
    %v778 = vadd.f32 %v698, %v777
    %v779 = vpop.f32.mrb[0].mxu0
    %780 = vmatprep.mubr.bf16.mxu0 0
    %781 = vmatmul.mubr.bf16.gmra.mrb[0].mxu0 %v393
    %v782 = vpop.f32.mrb[0].mxu0
    %v783 = vadd.f32 %v698, %v782
    %v784 = vpop.f32.mrb[0].mxu0
    %v785 = vpop.f32.mrb[0].mxu0
    %v786 = vadd.f32 %v698, %v785
    %v787 = vpop.f32.mrb[0].mxu0
    %788 = vmatprep.mubr.bf16.mxu0 0
    %789 = vmatmul.mubr.bf16.gmra.mrb[0].mxu0 %v394
    %v790 = vpop.f32.mrb[0].mxu0
    %v791 = vadd.f32 %v698, %v790
    %v792 = vpop.f32.mrb[0].mxu0
    %v793 = vpop.f32.mrb[0].mxu0
    %v794 = vadd.f32 %v698, %v793
    %v795 = vpop.f32.mrb[0].mxu0
    %796 = vdwg.mxu0
    %v797 = vmax.f32 %v735, 0.0
    %v798 = vmax.f32 %v738, 0.0
    %v799 = vmax.f32 %v743, 0.0
    %v800 = vmax.f32 %v746, 0.0
    %v801 = vmax.f32 %v751, 0.0
    %v802 = vmax.f32 %v754, 0.0
    %v803 = vmax.f32 %v759, 0.0
    %v804 = vmax.f32 %v762, 0.0
    %v805 = vmax.f32 %v767, 0.0
    %v806 = vmax.f32 %v770, 0.0
    %v807 = vmax.f32 %v775, 0.0
    %v808 = vmax.f32 %v778, 0.0
    %v809 = vmax.f32 %v783, 0.0
    %v810 = vmax.f32 %v786, 0.0
    %v811 = vmax.f32 %v791, 0.0
    %v812 = vmax.f32 %v794, 0.0
    %v813 = vpack.c.bf16 %v798, %v797
    %v814 = vpack.c.bf16 %v800, %v799
    %v815 = vpack.c.bf16 %v802, %v801
    %v816 = vpack.c.bf16 %v804, %v803
    %v817 = vpack.c.bf16 %v806, %v805
    %v818 = vpack.c.bf16 %v808, %v807
    %v819 = vpack.c.bf16 %v810, %v809
    %v820 = vpack.c.bf16 %v812, %v811
    %v821 = vld [vmem:[#allocation10] sm:$0xf]
    %v822 = vld [vmem:[#allocation10 + $0x4] sm:$0xf]
    %v823 = vld [vmem:[#allocation10 + $0x8] sm:$0xf]
    %v824 = vld [vmem:[#allocation10 + $0xc] sm:$0xf]
    %v825 = vld [vmem:[#allocation10 + $0x10] sm:$0xf]
    %v826 = vld [vmem:[#allocation10 + $0x14] sm:$0xf]
    %v827 = vld [vmem:[#allocation10 + $0x18] sm:$0xf]
    %v828 = vld [vmem:[#allocation10 + $0x1c] sm:$0xf]
    %v829 = vld [vmem:[#allocation10 + $0x20] sm:$0xf]
    %v830 = vld [vmem:[#allocation10 + $0x24] sm:$0xf]
    %v831 = vld [vmem:[#allocation10 + $0x28] sm:$0xf]
    %v832 = vld [vmem:[#allocation10 + $0x2c] sm:$0xf]
    %v833 = vld [vmem:[#allocation10 + $0x30] sm:$0xf]
    %v834 = vld [vmem:[#allocation10 + $0x34] sm:$0xf]
    %v835 = vld [vmem:[#allocation10 + $0x38] sm:$0xf]
    %v836 = vld [vmem:[#allocation10 + $0x3c] sm:$0xf]
    %v853 = vunpack.c.l.b16 %v821
    %v854 = vunpack.c.l.b16 %v822
    %v855 = vunpack.c.l.b16 %v823
    %v856 = vunpack.c.l.b16 %v824
    %v857 = vunpack.c.l.b16 %v825
    %v858 = vunpack.c.l.b16 %v826
    %v859 = vunpack.c.l.b16 %v827
    %v860 = vunpack.c.l.b16 %v828
    %v861 = vunpack.c.l.b16 %v829
    %v862 = vunpack.c.l.b16 %v830
    %v863 = vunpack.c.l.b16 %v831
    %v864 = vunpack.c.l.b16 %v832
    %v865 = vunpack.c.l.b16 %v833
    %v866 = vunpack.c.l.b16 %v834
    %v867 = vunpack.c.l.b16 %v835
    %v868 = vunpack.c.l.b16 %v836
    %v869 = vpack.c.b16 %v854, %v853
    %v870 = vpack.c.b16 %v856, %v855
    %v871 = vpack.c.b16 %v858, %v857
    %v872 = vpack.c.b16 %v860, %v859
    %v873 = vpack.c.b16 %v862, %v861
    %v874 = vpack.c.b16 %v864, %v863
    %v875 = vpack.c.b16 %v866, %v865
    %v876 = vpack.c.b16 %v868, %v867
    %885 = vmatprep.subr.bf16.mxu0 0
    %886 = vmatpush1.bf16.msra.mxu0 %v869
    %887 = vmatprep.subr.bf16.mxu0 0
    %888 = vmatpush1.bf16.msra.mxu0 %v870
    %889 = vmatprep.subr.bf16.mxu0 0
    %890 = vmatpush1.bf16.msra.mxu0 %v871
    %891 = vmatprep.subr.bf16.mxu0 0
    %892 = vmatpush1.bf16.msra.mxu0 %v872
    %893 = vmatprep.subr.bf16.mxu0 0
    %894 = vmatpush1.bf16.msra.mxu0 %v873
    %895 = vmatprep.subr.bf16.mxu0 0
    %896 = vmatpush1.bf16.msra.mxu0 %v874
    %897 = vmatprep.subr.bf16.mxu0 0
    %898 = vmatpush1.bf16.msra.mxu0 %v875
    %899 = vmatprep.subr.bf16.mxu0 0
    %900 = vmatpush1.bf16.msra.mxu0 %v876
    %901 = vmatprep.subr.bf16.mxu0 0
    %902 = vmatpush1.bf16.msra.mxu0 0
    %903 = vmatprep.subr.bf16.mxu0 0
    %904 = vmatpush1.bf16.msra.mxu0 0
    %905 = vmatprep.subr.bf16.mxu0 0
    %906 = vmatpush1.bf16.msra.mxu0 0
    %907 = vmatprep.subr.bf16.mxu0 0
    %908 = vmatpush1.bf16.msra.mxu0 0
    %909 = vmatprep.subr.bf16.mxu0 0
    %910 = vmatpush1.bf16.msra.mxu0 0
    %911 = vmatprep.subr.bf16.mxu0 0
    %912 = vmatpush1.bf16.msra.mxu0 0
    %913 = vmatprep.subr.bf16.mxu0 0
    %914 = vmatpush1.bf16.msra.mxu0 0
    %915 = vmatprep.subr.bf16.mxu0 0
    %916 = vmatpush1.bf16.msra.mxu0 0
    %917 = vmatprep.mubr.bf16.mxu0 0
    %918 = vmatmul.mubr.bf16.gmra.mrb[0].mxu0 %v813
    %v919 = vpop.f32.mrb[0].mxu0
    %v920 = vadd.f32 0.0, %v919
    %v921 = vpop.f32.mrb[0].mxu0
    %v922 = vpop.f32.mrb[0].mxu0
    %v923 = vadd.f32 0.0, %v922
    %v924 = vpop.f32.mrb[0].mxu0
    %925 = vmatprep.mubr.bf16.mxu0 0
    %926 = vmatmul.mubr.bf16.gmra.mrb[0].mxu0 %v814
    %v927 = vpop.f32.mrb[0].mxu0
    %v928 = vadd.f32 0.0, %v927
    %v929 = vpop.f32.mrb[0].mxu0
    %v930 = vpop.f32.mrb[0].mxu0
    %v931 = vadd.f32 0.0, %v930
    %v932 = vpop.f32.mrb[0].mxu0
    %933 = vmatprep.mubr.bf16.mxu0 0
    %934 = vmatmul.mubr.bf16.gmra.mrb[0].mxu0 %v815
    %v935 = vpop.f32.mrb[0].mxu0
    %v936 = vadd.f32 0.0, %v935
    %v937 = vpop.f32.mrb[0].mxu0
    %v938 = vpop.f32.mrb[0].mxu0
    %v939 = vadd.f32 0.0, %v938
    %v940 = vpop.f32.mrb[0].mxu0
    %941 = vmatprep.mubr.bf16.mxu0 0
    %942 = vmatmul.mubr.bf16.gmra.mrb[0].mxu0 %v816
    %v943 = vpop.f32.mrb[0].mxu0
    %v944 = vadd.f32 0.0, %v943
    %v945 = vpop.f32.mrb[0].mxu0
    %v946 = vpop.f32.mrb[0].mxu0
    %v947 = vadd.f32 0.0, %v946
    %v948 = vpop.f32.mrb[0].mxu0
    %949 = vmatprep.mubr.bf16.mxu0 0
    %950 = vmatmul.mubr.bf16.gmra.mrb[0].mxu0 %v817
    %v951 = vpop.f32.mrb[0].mxu0
    %v952 = vadd.f32 0.0, %v951
    %v953 = vpop.f32.mrb[0].mxu0
    %v954 = vpop.f32.mrb[0].mxu0
    %v955 = vadd.f32 0.0, %v954
    %v956 = vpop.f32.mrb[0].mxu0
    %957 = vmatprep.mubr.bf16.mxu0 0
    %958 = vmatmul.mubr.bf16.gmra.mrb[0].mxu0 %v818
    %v959 = vpop.f32.mrb[0].mxu0
    %v960 = vadd.f32 0.0, %v959
    %v961 = vpop.f32.mrb[0].mxu0
    %v962 = vpop.f32.mrb[0].mxu0
    %v963 = vadd.f32 0.0, %v962
    %v964 = vpop.f32.mrb[0].mxu0
    %965 = vmatprep.mubr.bf16.mxu0 0
    %966 = vmatmul.mubr.bf16.gmra.mrb[0].mxu0 %v819
    %v967 = vpop.f32.mrb[0].mxu0
    %v968 = vadd.f32 0.0, %v967
    %v969 = vpop.f32.mrb[0].mxu0
    %v970 = vpop.f32.mrb[0].mxu0
    %v971 = vadd.f32 0.0, %v970
    %v972 = vpop.f32.mrb[0].mxu0
    %973 = vmatprep.mubr.bf16.mxu0 0
    %974 = vmatmul.mubr.bf16.gmra.mrb[0].mxu0 %v820
    %v975 = vpop.f32.mrb[0].mxu0
    %v976 = vadd.f32 0.0, %v975
    %v977 = vpop.f32.mrb[0].mxu0
    %v978 = vpop.f32.mrb[0].mxu0
    %v979 = vadd.f32 0.0, %v978
    %v980 = vpop.f32.mrb[0].mxu0
    %981 = vdwg.mxu0
    %v982 = vpack.c.bf16 %v923, %v920
    %v983 = vpack.c.bf16 %v931, %v928
    %v984 = vpack.c.bf16 %v939, %v936
    %v985 = vpack.c.bf16 %v947, %v944
    %v986 = vpack.c.bf16 %v955, %v952
    %v987 = vpack.c.bf16 %v963, %v960
    %v988 = vpack.c.bf16 %v971, %v968
    %v989 = vpack.c.bf16 %v979, %v976
    %v990 = vld [vmem:[%s7] sm:$0x1]
    %v992 = vlaneseq
    %v993 = vshrl.u32 %v992, 7
    %v994 = vsub.s32 0, %v993
    %v995 = vrot.slane %v990, %v994
    %997 = vmatprep.subr.bf16.mxu0 0
    %998 = vmatpush1.bf16.msra.mxu0 %v982
    %999 = vmatprep.subr.bf16.mxu0 0
    %1000 = vmatpush1.bf16.msra.mxu0 %v983
    %1001 = vmatprep.subr.bf16.mxu0 0
    %1002 = vmatpush1.bf16.msra.mxu0 %v984
    %1003 = vmatprep.subr.bf16.mxu0 0
    %1004 = vmatpush1.bf16.msra.mxu0 %v985
    %1005 = vmatprep.subr.bf16.mxu0 0
    %1006 = vmatpush1.bf16.msra.mxu0 %v986
    %1007 = vmatprep.subr.bf16.mxu0 0
    %1008 = vmatpush1.bf16.msra.mxu0 %v987
    %1009 = vmatprep.subr.bf16.mxu0 0
    %1010 = vmatpush1.bf16.msra.mxu0 %v988
    %1011 = vmatprep.subr.bf16.mxu0 0
    %1012 = vmatpush1.bf16.msra.mxu0 %v989
    %1013 = vmatprep.subr.bf16.mxu0 0
    %1014 = vmatpush1.bf16.msra.mxu0 0
    %1015 = vmatprep.subr.bf16.mxu0 0
    %1016 = vmatpush1.bf16.msra.mxu0 0
    %1017 = vmatprep.subr.bf16.mxu0 0
    %1018 = vmatpush1.bf16.msra.mxu0 0
    %1019 = vmatprep.subr.bf16.mxu0 0
    %1020 = vmatpush1.bf16.msra.mxu0 0
    %1021 = vmatprep.subr.bf16.mxu0 0
    %1022 = vmatpush1.bf16.msra.mxu0 0
    %1023 = vmatprep.subr.bf16.mxu0 0
    %1024 = vmatpush1.bf16.msra.mxu0 0
    %1025 = vmatprep.subr.bf16.mxu0 0
    %1026 = vmatpush1.bf16.msra.mxu0 0
    %1027 = vmatprep.subr.bf16.mxu0 0
    %1028 = vmatpush1.bf16.msra.mxu0 0
    %1029 = vmatprep.mubr.bf16.mxu0 0
    %1030 = vmatmul.mubr.bf16.gmra.mrb[0].mxu0 %v387
    %v1031 = vpop.f32.mrb[0].mxu0
    %v1032 = vadd.f32 %v995, %v1031
    %v1033 = vpop.f32.mrb[0].mxu0
    %v1034 = vpop.f32.mrb[0].mxu0
    %v1035 = vadd.f32 %v995, %v1034
    %v1036 = vpop.f32.mrb[0].mxu0
    %1037 = vmatprep.mubr.bf16.mxu0 0
    %1038 = vmatmul.mubr.bf16.gmra.mrb[0].mxu0 %v388
    %v1039 = vpop.f32.mrb[0].mxu0
    %v1040 = vadd.f32 %v995, %v1039
    %v1041 = vpop.f32.mrb[0].mxu0
    %v1042 = vpop.f32.mrb[0].mxu0
    %v1043 = vadd.f32 %v995, %v1042
    %v1044 = vpop.f32.mrb[0].mxu0
    %1045 = vmatprep.mubr.bf16.mxu0 0
    %1046 = vmatmul.mubr.bf16.gmra.mrb[0].mxu0 %v389
    %v1047 = vpop.f32.mrb[0].mxu0
    %v1048 = vadd.f32 %v995, %v1047
    %v1049 = vpop.f32.mrb[0].mxu0
    %v1050 = vpop.f32.mrb[0].mxu0
    %v1051 = vadd.f32 %v995, %v1050
    %v1052 = vpop.f32.mrb[0].mxu0
    %1053 = vmatprep.mubr.bf16.mxu0 0
    %1054 = vmatmul.mubr.bf16.gmra.mrb[0].mxu0 %v390
    %v1055 = vpop.f32.mrb[0].mxu0
    %v1056 = vadd.f32 %v995, %v1055
    %v1057 = vpop.f32.mrb[0].mxu0
    %v1058 = vpop.f32.mrb[0].mxu0
    %v1059 = vadd.f32 %v995, %v1058
    %v1060 = vpop.f32.mrb[0].mxu0
    %1061 = vmatprep.mubr.bf16.mxu0 0
    %1062 = vmatmul.mubr.bf16.gmra.mrb[0].mxu0 %v391
    %v1063 = vpop.f32.mrb[0].mxu0
    %v1064 = vadd.f32 %v995, %v1063
    %v1065 = vpop.f32.mrb[0].mxu0
    %v1066 = vpop.f32.mrb[0].mxu0
    %v1067 = vadd.f32 %v995, %v1066
    %v1068 = vpop.f32.mrb[0].mxu0
    %1069 = vmatprep.mubr.bf16.mxu0 0
    %1070 = vmatmul.mubr.bf16.gmra.mrb[0].mxu0 %v392
    %v1071 = vpop.f32.mrb[0].mxu0
    %v1072 = vadd.f32 %v995, %v1071
    %v1073 = vpop.f32.mrb[0].mxu0
    %v1074 = vpop.f32.mrb[0].mxu0
    %v1075 = vadd.f32 %v995, %v1074
    %v1076 = vpop.f32.mrb[0].mxu0
    %1077 = vmatprep.mubr.bf16.mxu0 0
    %1078 = vmatmul.mubr.bf16.gmra.mrb[0].mxu0 %v393
    %v1079 = vpop.f32.mrb[0].mxu0
    %v1080 = vadd.f32 %v995, %v1079
    %v1081 = vpop.f32.mrb[0].mxu0
    %v1082 = vpop.f32.mrb[0].mxu0
    %v1083 = vadd.f32 %v995, %v1082
    %v1084 = vpop.f32.mrb[0].mxu0
    %1085 = vmatprep.mubr.bf16.mxu0 0
    %1086 = vmatmul.mubr.bf16.gmra.mrb[0].mxu0 %v394
    %v1087 = vpop.f32.mrb[0].mxu0
    %v1088 = vadd.f32 %v995, %v1087
    %v1089 = vpop.f32.mrb[0].mxu0
    %v1090 = vpop.f32.mrb[0].mxu0
    %v1091 = vadd.f32 %v995, %v1090
    %v1092 = vpop.f32.mrb[0].mxu0
    %1093 = vdwg.mxu0
    %1094 = vst [vmem:[#allocation11] sm:$0xff] %v1032
    %1095 = vst [vmem:[#allocation11 + $0x8] sm:$0xff] %v1035
    %1096 = vst [vmem:[#allocation11 + $0x10] sm:$0xff] %v1040
    %1097 = vst [vmem:[#allocation11 + $0x18] sm:$0xff] %v1043
    %1098 = vst [vmem:[#allocation11 + $0x20] sm:$0xff] %v1048
    %1099 = vst [vmem:[#allocation11 + $0x28] sm:$0xff] %v1051
    %1100 = vst [vmem:[#allocation11 + $0x30] sm:$0xff] %v1056
    %1101 = vst [vmem:[#allocation11 + $0x38] sm:$0xff] %v1059
    %1102 = vst [vmem:[#allocation11 + $0x40] sm:$0xff] %v1064
    %1103 = vst [vmem:[#allocation11 + $0x48] sm:$0xff] %v1067
    %1104 = vst [vmem:[#allocation11 + $0x50] sm:$0xff] %v1072
    %1105 = vst [vmem:[#allocation11 + $0x58] sm:$0xff] %v1075
    %1106 = vst [vmem:[#allocation11 + $0x60] sm:$0xff] %v1080
    %1107 = vst [vmem:[#allocation11 + $0x68] sm:$0xff] %v1083
    %1108 = vst [vmem:[#allocation11 + $0x70] sm:$0xff] %v1088
    %1109 = vst [vmem:[#allocation11 + $0x78] sm:$0xff] %v1091
    // Predicated region
    $region54: #{tpu_custom_call.1} parent=1 // pred_check
      _
    $region55: #{tpu_custom_call.1} parent=1 // pred_check_branch
      %1111 = sbr.rel (0) target = $region57
    $region56: #{tpu_custom_call.1} parent=1 // pred_region
      %s1113 = ssub.s32 2048, 2048
      %1114 = vsyncadd [#allocation4], %s1113
      %s1115 = sshll.u32 [#allocation11], 4
      %s1116 = int_to_ptr.vmem [resolvable:$true] %s1115
      %1121 = dma.vmem_to_hbm [thread:$0]  %s1116, 2048, %s8, [#allocation4], 128, 128, 8
    $region57: #{tpu_custom_call.1} parent=1 // pred_fallthru
      _
    // Predicated region
    $region58: #{tpu_custom_call.1} parent=1 // pred_check
      _
    $region59: #{tpu_custom_call.1} parent=1 // pred_check_branch
      %1123 = sbr.rel (0) target = $region61
    $region60: #{tpu_custom_call.1} parent=1 // pred_region
      %1124 = dma.done [#allocation4], 2048
    $region61: #{tpu_custom_call.1} parent=1 // pred_fallthru
      _
    %1125 = vsyncpa [#allocation3], 1
    %1126 = vsyncpa [#allocation6], 1
    %1127 = vsyncpa [#allocation9], 1
    %1128 = vsyncpa [#allocation4], 1

</llo_original>
